<compile_context>
chip_gen: v7x
topology: tpu7x:2x2x1
jax: 0.10.0
libtpu: 0.0.40
codegen_flags: <defaults>
</compile_context>

<pallas_src>
import functools

import jax
import jax.numpy as jnp
from jax.experimental import pallas as pl
from jax.experimental.pallas import tpu as pltpu

LANE = 128


def _ru(n, m):
    return ((n + m - 1) // m) * m


def _pad_lanes(x, n):
    p = n - x.shape[-1]
    if p == 0:
        return x
    return jnp.pad(x, [(0, 0)] * (x.ndim - 1) + [(0, p)])


def _tiles(n, max_tile):
    """Tile a flattened spatial axis of length n -> (tile, padded_n, num_tiles)."""
    t = min(max_tile, _ru(n, LANE))
    n_pad = _ru(n, t)
    return t, n_pad, n_pad // t


def _cparams(block_bytes, sem):
    lim = int(min(max(2 * block_bytes + (4 << 20), 8 << 20), 48 << 20))
    return pltpu.CompilerParams(dimension_semantics=sem, vmem_limit_bytes=lim)


# ----------------------------------------------------------------------------- warp glue

def _bilinear_taps(img, flow2, n_pad):
    """4-tap bilinear backward-warp gather (border padding), bf16 outputs.

    Returns taps (B, 4*C, n_pad) (tap-major, sublane-dense) and weights (B, 4, n_pad),
    both bf16, zero in padded lanes.
    # TODO(synk): the per-pixel gather runs as an XLA gather in glue -- Mosaic has no
    # general cross-lane gather primitive; all downstream math is fused into Pallas.
    """
    B, C, H, W = img.shape
    HW = H * W
    img_flat = img.reshape(B, C, HW).astype(jnp.bfloat16)
    fx = flow2[:, 0].reshape(B, HW)
    fy = flow2[:, 1].reshape(B, HW)
    gx = jnp.tile(jnp.arange(W, dtype=jnp.float32), H)[None]
    gy = jnp.repeat(jnp.arange(H, dtype=jnp.float32), W)[None]
    sx = jnp.clip(gx + fx, 0.0, float(W - 1))
    sy = jnp.clip(gy + fy, 0.0, float(H - 1))
    x0 = jnp.floor(sx)
    y0 = jnp.floor(sy)
    wx = sx - x0
    wy = sy - y0
    x0i = x0.astype(jnp.int32)
    y0i = y0.astype(jnp.int32)
    x1i = jnp.minimum(x0i + 1, W - 1)
    y1i = jnp.minimum(y0i + 1, H - 1)
    idx = jnp.stack([y0i * W + x0i, y0i * W + x1i,
                     y1i * W + x0i, y1i * W + x1i], axis=1)            # (B, 4, HW)
    wts = jnp.stack([(1.0 - wy) * (1.0 - wx), (1.0 - wy) * wx,
                     wy * (1.0 - wx), wy * wx], axis=1)                # (B, 4, HW)
    # No (B,4,C,HW) source broadcast: gather on (B,C,HW) with broadcast indices.
    taps = jnp.take_along_axis(img_flat, idx.reshape(B, 1, 4 * HW), axis=2)   # (B,C,4HW)
    taps = taps.reshape(B, C, 4, HW).transpose(0, 2, 1, 3).reshape(B, 4 * C, HW)
    return _pad_lanes(taps, n_pad), _pad_lanes(wts.astype(jnp.bfloat16), n_pad)


def _warp_operands(im0, im1, flow4, n_pad):
    t0, w0 = _bilinear_taps(im0, flow4[:, 0:2], n_pad)
    t1, w1 = _bilinear_taps(im1, flow4[:, 2:4], n_pad)
    return jnp.concatenate([t0, t1], axis=1), jnp.concatenate([w0, w1], axis=1)


# ----------------------------------------------------------------------------- kernels

def _wsum4(taps, wts, C):
    """taps (4*C, T) f32, wts (4, T) f32 -> 4-tap bilinear accumulate (C, T)."""
    return (taps[0 * C:1 * C] * wts[0:1] + taps[1 * C:2 * C] * wts[1:2] +
            taps[2 * C:3 * C] * wts[2:3] + taps[3 * C:4 * C] * wts[3:4])


def _softmax2_ch0(m):
    """softmax over 2 mask channels, channel 0.  m (2, T) f32 -> (1, T)."""
    return pl.reciprocal(1.0 + jnp.exp(m[1:2] - m[0:1]), approx=False)


def _warp_pair_kernel(t_ref, w_ref, o_ref, *, C):
    t = t_ref[0].astype(jnp.float32)               # (8C, T)
    w = w_ref[0].astype(jnp.float32)               # (8, T)
    o_ref[0, 0] = _wsum4(t[:4 * C], w[:4], C).astype(o_ref.dtype)
    o_ref[0, 1] = _wsum4(t[4 * C:], w[4:], C).astype(o_ref.dtype)


def _warp_merge_kernel(t_ref, w_ref, m_ref, o_ref, *, C):
    t = t_ref[0].astype(jnp.float32)
    w = w_ref[0].astype(jnp.float32)
    s0 = _softmax2_ch0(m_ref[0].astype(jnp.float32))
    merged = _wsum4(t[:4 * C], w[:4], C) * s0 + _wsum4(t[4 * C:], w[4:], C) * (1.0 - s0)
    o_ref[0] = merged.astype(o_ref.dtype)


def _student_distill_kernel(t_ref, w_ref, a_ref, o_ref, *, C, HW, TILE, margin):
    """Fused student warp-merge + masked RMS flow-error; per-(batch,tile) partial sum."""
    t = t_ref[0].astype(jnp.float32)               # (8C, T)
    w = w_ref[0].astype(jnp.float32)               # (8, T)
    a = a_ref[0].astype(jnp.float32)               # mask(2) | gt(C) | m_tea(C) | f_tea(4) | f_stu(4)
    s0 = _softmax2_ch0(a[0:2])
    gt = a[2:2 + C]
    m_tea = a[2 + C:2 + 2 * C]
    f_tea = a[2 + 2 * C:6 + 2 * C]
    f_stu = a[6 + 2 * C:10 + 2 * C]
    merged = _wsum4(t[:4 * C], w[:4], C) * s0 + _wsum4(t[4 * C:], w[4:], C) * (1.0 - s0)
    err_s = jnp.mean(jnp.abs(merged - gt), axis=0, keepdims=True)
    err_t = jnp.mean(jnp.abs(m_tea - gt), axis=0, keepdims=True)
    lane = jax.lax.broadcasted_iota(jnp.int32, (1, TILE), 1) + pl.program_id(1) * TILE
    valid = (lane < HW).astype(jnp.float32)        # padded lanes never contribute
    loss_mask = (err_s > err_t + margin).astype(jnp.float32) * valid
    d = f_tea - f_stu
    dist = jnp.sqrt(jnp.mean(d * d, axis=0, keepdims=True))
    partial = jnp.sum(dist * loss_mask)
    r = jax.lax.broadcasted_iota(jnp.int32, (8, LANE), 0)
    c = jax.lax.broadcasted_iota(jnp.int32, (8, LANE), 1)
    o_ref[0, 0] = jnp.where((r == 0) & (c == 0), partial, 0.0)


def _conv3x3_kernel(x_ref, w_ref, b_ref, o_ref, rhs_ref, *, taps, cin_p, n_tile, act):
    """One output tile: assemble the 9-tap (9*Cin_p, n_tile) RHS in VMEM, one deep MXU dot.

    x_ref: (1, 1, PC, tile_in) bf16 overlapped input slice (tile + tap halo)
    w_ref: (Cout, 9*cin_p) bf16 tap-folded weights;  b_ref: (Cout, 1) f32
    o_ref: (1, Cout, n_tile);  rhs_ref: VMEM (9*cin_p, n_tile) bf16 scratch
    """
    for k, (ph, sh) in enumerate(taps):
        rhs_ref[k * cin_p:(k + 1) * cin_p, :] = \
            x_ref[0, 0, ph * cin_p:(ph + 1) * cin_p, sh:sh + n_tile]
    y = jnp.dot(w_ref[...], rhs_ref[...], preferred_element_type=jnp.float32) + b_ref[...]
    if act:
        # TODO(synk): original RIFE conv blocks use PReLU; approximated with LeakyReLU(0.1).
        y = jnp.where(y >= 0.0, y, 0.1 * y)
    o_ref[0] = y.astype(o_ref.dtype)


# ----------------------------------------------------------------------------- wrappers

def warp_pair_pallas(im0, im1, flow4, *, max_tile=2048):
    """wp0 = warp(im0, flow4[:, :2]), wp1 = warp(im1, flow4[:, 2:4])."""
    B, C, H, W = im0.shape
    HW = H * W
    tile, n_pad, T = _tiles(HW, max_tile)
    taps, wts = _warp_operands(im0, im1, flow4, n_pad)
    bb = tile * (8 * C * 2 + 8 * 2 + 2 * C * 4)
    out = pl.pallas_call(
        functools.partial(_warp_pair_kernel, C=C),
        out_shape=jax.ShapeDtypeStruct((B, 2, C, n_pad), jnp.float32),
        grid=(B, T),
        in_specs=[pl.BlockSpec((1, 8 * C, tile), lambda b, t: (b, 0, t)),
                  pl.BlockSpec((1, 8, tile), lambda b, t: (b, 0, t))],
        out_specs=pl.BlockSpec((1, 2, C, tile), lambda b, t: (b, 0, 0, t)),
        compiler_params=_cparams(bb, ("parallel", "parallel")),
    )(taps, wts)
    wp0 = out[:, 0, :, :HW].reshape(B, C, H, W)
    wp1 = out[:, 1, :, :HW].reshape(B, C, H, W)
    return wp0, wp1


def warp_merge_pallas(im0, im1, flow4, mask_logits, *, max_tile=2048):
    """Fused: backward-warp im0/im1, 2-way softmax of mask, blend.  Returns NCHW + flat."""
    B, C, H, W = im0.shape
    HW = H * W
    tile, n_pad, T = _tiles(HW, max_tile)
    taps, wts = _warp_operands(im0, im1, flow4, n_pad)
    m = _pad_lanes(mask_logits.reshape(B, 2, HW).astype(jnp.bfloat16), n_pad)
    bb = tile * (8 * C * 2 + 8 * 2 + 2 * 2 + C * 4)
    merged_flat = pl.pallas_call(
        functools.partial(_warp_merge_kernel, C=C),
        out_shape=jax.ShapeDtypeStruct((B, C, n_pad), jnp.float32),
        grid=(B, T),
        in_specs=[pl.BlockSpec((1, 8 * C, tile), lambda b, t: (b, 0, t)),
                  pl.BlockSpec((1, 8, tile), lambda b, t: (b, 0, t)),
                  pl.BlockSpec((1, 2, tile), lambda b, t: (b, 0, t))],
        out_specs=pl.BlockSpec((1, C, tile), lambda b, t: (b, 0, t)),
        compiler_params=_cparams(bb, ("parallel", "parallel")),
    )(taps, wts, m)
    return merged_flat[:, :, :HW].reshape(B, C, H, W), merged_flat


def student_distill_pallas(im0, im1, flow_s, mask_logits, gt, merged_tea_flat, flow_tea,
                           margin, *, max_tile=2048):
    """mean_{B,H,W} sqrt(mean_ch((f_tea - f_stu)^2)) * [|m_stu-gt| > |m_tea-gt| + margin]."""
    B, C, H, W = im0.shape
    HW = H * W
    tile, n_pad, T = _tiles(HW, max_tile)
    taps, wts = _warp_operands(im0, im1, flow_s, n_pad)
    aux = jnp.concatenate([mask_logits.reshape(B, 2, HW),
                           gt.reshape(B, C, HW),
                           merged_tea_flat[:, :, :HW],
                           flow_tea.reshape(B, 4, HW),
                           flow_s.reshape(B, 4, HW)], axis=1)           # (B, 2+2C+8, HW)
    A = aux.shape[1]
    aux = _pad_lanes(aux.astype(jnp.bfloat16), n_pad)
    bb = tile * (8 * C * 2 + 8 * 2 + A * 2) + 8 * LANE * 4
    partial = pl.pallas_call(
        functools.partial(_student_distill_kernel, C=C, HW=HW, TILE=tile,
                          margin=float(margin)),
        out_shape=jax.ShapeDtypeStruct((B, T, 8, LANE), jnp.float32),
        grid=(B, T),
        in_specs=[pl.BlockSpec((1, 8 * C, tile), lambda b, t: (b, 0, t)),
                  pl.BlockSpec((1, 8, tile), lambda b, t: (b, 0, t)),
                  pl.BlockSpec((1, A, tile), lambda b, t: (b, 0, t))],
        out_specs=pl.BlockSpec((1, 1, 8, LANE), lambda b, t: (b, t, 0, 0)),
        compiler_params=_cparams(bb, ("parallel", "parallel")),
    )(taps, wts, aux)
    return jnp.sum(partial) / jnp.float32(B * HW)


def conv3x3_pallas(x, w, b, *, stride=1, act=True, out_dtype=jnp.float32, max_tile=1024):
    """3x3 conv, padding=1, stride in {1,2}.  x (B,Cin,H,W); w (Cout,Cin,3,3); b (Cout,).

    Glue zero-pads once, (for stride 2) space-to-depth decomposes into 4 phases, and
    stages per-tile overlapped input slices (output tile + tap halo).  The kernel folds
    the 9 taps into the contraction dim (K = 9*Cin_pad) and issues one MXU dot per tile.
    # TODO(synk): the overlapped per-tile staging is an extra XLA copy of the activation;
    # replace with an in-kernel halo DMA (manual double-buffer) for very large images.
    """
    B, Cin, H, W = x.shape
    Cout = w.shape[0]
    cin_p = _ru(Cin, 16)                          # bf16 sublane-aligned channel groups
    xq = jnp.pad(x, ((0, 0), (0, cin_p - Cin), (0, 0), (0, 0)))
    xp = jnp.pad(xq, ((0, 0), (0, 0), (1, 1), (1, 1)))
    if stride == 1:
        Hs, Ws, Ho, Wo, nphase = H + 2, W + 2, H, W, 1
        slab = xp.reshape(B, cin_p, Hs * Ws)
        taps = tuple((0, ky * Ws + kx) for ky in range(3) for kx in range(3))
    elif stride == 2:
        assert H % 2 == 0 and W % 2 == 0
        Hs, Ws, Ho, Wo, nphase = H // 2 + 1, W // 2 + 1, H // 2, W // 2, 4
        phases = [xp[:, :, a::2, c::2] for a in (0, 1) for c in (0, 1)]
        slab = jnp.concatenate(phases, axis=1).reshape(B, 4 * cin_p, Hs * Ws)
        taps = tuple(((ky % 2) * 2 + (kx % 2), (ky // 2) * Ws + (kx // 2))
                     for ky in range(3) for kx in range(3))
    else:
        raise ValueError("stride must be 1 or 2")

    PC = nphase * cin_p
    kmax = max(sh for _, sh in taps)
    n_total = Ho * Ws                             # outputs laid out with padded width Ws
    n_tile, n_padded, T = _tiles(n_total, max_tile)
    tile_in = _ru(n_tile + kmax, LANE)
    need = (T - 1) * n_tile + tile_in
    slab = _pad_lanes(slab, max(need, slab.shape[-1])).astype(jnp.bfloat16)
    xt = jnp.stack([slab[:, :, t * n_tile:t * n_tile + tile_in] for t in range(T)],
                   axis=1)                        # (B, T, PC, tile_in) overlapped tiles
    wq = jnp.pad(w, ((0, 0), (0, cin_p - Cin), (0, 0), (0, 0)))
    w_fold = wq.transpose(0, 2, 3, 1).reshape(Cout, 9 * cin_p).astype(jnp.bfloat16)
    bm = b.reshape(Cout, 1).astype(jnp.float32)

    blk_bytes = (PC * tile_in * 2 + Cout * 9 * cin_p * 2 + Cout * 4 +
                 Cout * n_tile * 4 + 9 * cin_p * n_tile * 2)
    out = pl.pallas_call(
        functools.partial(_conv3x3_kernel, taps=taps, cin_p=cin_p, n_tile=n_tile, act=act),
        out_shape=jax.ShapeDtypeStruct((B, Cout, n_padded), out_dtype),
        grid=(B, T),
        in_specs=[pl.BlockSpec((1, 1, PC, tile_in), lambda bi, ti: (bi, ti, 0, 0)),
                  pl.BlockSpec((Cout, 9 * cin_p), lambda bi, ti: (0, 0)),   # resident
                  pl.BlockSpec((Cout, 1), lambda bi, ti: (0, 0))],
        out_specs=pl.BlockSpec((1, Cout, n_tile), lambda bi, ti: (bi, 0, ti)),
        scratch_shapes=[pltpu.VMEM((9 * cin_p, n_tile), jnp.bfloat16)],
        compiler_params=_cparams(blk_bytes, ("parallel", "parallel")),
    )(xt, w_fold, bm)
    return out[:, :, :n_total].reshape(B, Cout, Ho, Ws)[:, :, :, :Wo]


# ----------------------------------------------------------------------------- IFBlock

def init_ifblock_params(key, c=32, in_planes=21):
    """RIFE-style IFBlock(17+4, c, mask=True) parameters, deterministic init."""
    def conv_init(k, cout, cin):
        kw, _ = jax.random.split(k)
        wgt = jax.random.normal(kw, (cout, cin, 3, 3), jnp.float32) * (0.1 / (cin * 9) ** 0.5)
        return wgt, jnp.zeros((cout,), jnp.float32)

    keys = jax.random.split(key, 7)
    p = {}
    p["c0_1w"], p["c0_1b"] = conv_init(keys[0], c // 2, in_planes)   # stride 2
    p["c0_2w"], p["c0_2b"] = conv_init(keys[1], c, c // 2)           # stride 2
    for i in range(4):
        p[f"cb{i}w"], p[f"cb{i}b"] = conv_init(keys[2 + i], c, c)
    p["lastw"], p["lastb"] = conv_init(keys[6], 6, c)                # 4 flow + 2 mask
    return p


def ifblock_forward(params, inp, flow):
    """IFBlock(17+4 ch, mask=True) at scale=1.  Returns (flow_d, mask_d) at input res."""
    x = jnp.concatenate([inp, flow], axis=1)                          # (B, 21, H, W)
    x = conv3x3_pallas(x, params["c0_1w"], params["c0_1b"], stride=2, act=True,
                       out_dtype=jnp.bfloat16)
    x = conv3x3_pallas(x, params["c0_2w"], params["c0_2b"], stride=2, act=True,
                       out_dtype=jnp.bfloat16)
    y = x
    for i in range(4):
        y = conv3x3_pallas(y, params[f"cb{i}w"], params[f"cb{i}b"], stride=1, act=True,
                           out_dtype=jnp.bfloat16)
    x = x + y                                                         # residual conv block
    # TODO(synk): fuse the whole conv tower into one pallas_call with the quarter-res
    # activation resident in VMEM to remove the per-layer HBM round trips.
    t = conv3x3_pallas(x, params["lastw"], params["lastb"], stride=1, act=False,
                       out_dtype=jnp.float32)
    # TODO(synk): original lastconv is ConvTranspose2d(c, 6, 4, 2, 1) + x2 bilinear;
    # approximated here as conv3x3 + x4 bilinear upsample (glue).
    B, C6, h, w = t.shape
    t = jax.image.resize(t, (B, C6, h * 4, w * 4), method="bilinear")
    return t[:, 0:4], t[:, 4:6]


# ----------------------------------------------------------------------------- FlowTeacher

def flow_teacher_forward(params, im0, im1, flow, mask, gt,
                         student_flow_list, w_tea, margin):
    sg = jax.lax.stop_gradient

    # teacher refinement (IFBlock sees detached inputs, as in the PyTorch module)
    wp0, wp1 = warp_pair_pallas(im0, im1, flow)
    inp = sg(jnp.concatenate([im0, im1, wp0, wp1, mask, gt], axis=1))  # 17 channels
    flow_d, mask_d = ifblock_forward(params, inp, sg(flow))            # recalc_mask=True

    flow_teacher = sg(flow) + flow_d
    mask_teacher_logits = sg(mask) + mask_d

    merged_teacher, merged_tea_flat = warp_merge_pallas(
        im0, im1, flow_teacher, mask_teacher_logits)                   # fused warp+merge

    # student distillation loss (teacher targets detached)
    assert len(student_flow_list) == len(w_tea)
    flow_tea_sg = sg(flow_teacher)
    merged_tea_sg = sg(merged_tea_flat)
    loss_distill = jnp.float32(0.0)
    for (flow_s, scale), w in zip(student_flow_list, w_tea):
        if w == 0:
            continue
        if scale != 1:
            b_, c4, hs, ws = flow_s.shape
            flow_s = jax.image.resize(
                flow_s, (b_, c4, hs * scale, ws * scale), method="bilinear") * float(scale)
        loss_distill = loss_distill + w * student_distill_pallas(
            im0, im1, flow_s, mask, gt, merged_tea_sg, flow_tea_sg, margin)

    # TODO(synk): Bucket (bkt) visualization hooks have no Pallas equivalent; skipped.
    return {"loss_distill": loss_distill, "merged_tea": merged_teacher}


# ----------------------------------------------------------------------------- demo

if __name__ == "__main__":
    key = jax.random.PRNGKey(0)
    B, H, W = 2, 16, 16
    ks = jax.random.split(key, 8)

    im0 = jax.random.uniform(ks[0], (B, 3, H, W), jnp.float32)
    im1 = jax.random.uniform(ks[1], (B, 3, H, W), jnp.float32)
    gt = jax.random.uniform(ks[2], (B, 3, H, W), jnp.float32)
    flow = jax.random.normal(ks[3], (B, 4, H, W), jnp.float32) * 2.0
    mask = jax.random.normal(ks[4], (B, 2, H, W), jnp.float32)

    flow_stu0 = jax.random.normal(ks[5], (B, 4, H, W), jnp.float32) * 2.0        # scale 1
    flow_stu1 = jax.random.normal(ks[6], (B, 4, H // 2, W // 2), jnp.float32)    # scale 2

    params = init_ifblock_params(ks[7], c=32, in_planes=21)

    student_flow_list = [(flow_stu0, 1), (flow_stu1, 2)]
    w_tea = [1.0, 0.5]
    margin = 0.01

    out = flow_teacher_forward(params, im0, im1, flow, mask, gt,
                               student_flow_list, w_tea, margin)
    jax.block_until_ready(out["merged_tea"])
    jax.block_until_ready(out["loss_distill"])
    assert out["merged_tea"].shape == (B, 3, H, W)
    assert out["loss_distill"].shape == ()
    print("KERNEL_OK")
</pallas_src>

<mosaic_0001>
module attributes {stable_mosaic.version = 11 : i64} {
  func.func @_warp_pair_kernel(%arg0: i32, %arg1: i32, %arg2: memref<1x24x256xbf16, #tpu.memory_space<vmem>>, %arg3: memref<1x8x256xbf16, #tpu.memory_space<vmem>>, %arg4: memref<1x2x3x256xf32, #tpu.memory_space<vmem>>) attributes {dimension_semantics = [#tpu.dimension_semantics<parallel>, #tpu.dimension_semantics<parallel>], iteration_bounds = array<i64: 2, 1>, scalar_prefetch = 0 : i64, scratch_operands = 0 : i64, tpu.core_type = #tpu.core_type<tc>, window_params = [{transform_indices = @transform_0, window_bounds = array<i64: 1, 24, 256>}, {transform_indices = @transform_1, window_bounds = array<i64: 1, 8, 256>}, {transform_indices = @transform_2, window_bounds = array<i64: 1, 2, 3, 256>}]} {
    %c0 = arith.constant 0 : index
    %c0_0 = arith.constant 0 : index
    %c0_1 = arith.constant 0 : index
    %0 = vector.load %arg2[%c0, %c0_0, %c0_1] : memref<1x24x256xbf16, #tpu.memory_space<vmem>>, vector<1x24x256xbf16>
    %1 = vector.shape_cast %0 : vector<1x24x256xbf16> to vector<24x256xbf16>
    %2 = arith.extf %1 : vector<24x256xbf16> to vector<24x256xf32>
    %c0_2 = arith.constant 0 : index
    %c0_3 = arith.constant 0 : index
    %c0_4 = arith.constant 0 : index
    %3 = vector.load %arg3[%c0_2, %c0_3, %c0_4] : memref<1x8x256xbf16, #tpu.memory_space<vmem>>, vector<1x8x256xbf16>
    %4 = vector.shape_cast %3 : vector<1x8x256xbf16> to vector<8x256xbf16>
    %5 = arith.extf %4 : vector<8x256xbf16> to vector<8x256xf32>
    %6 = vector.extract_strided_slice %2 {offsets = [0, 0], sizes = [12, 256], strides = [1, 1]} : vector<24x256xf32> to vector<12x256xf32>
    %7 = vector.extract_strided_slice %5 {offsets = [0, 0], sizes = [4, 256], strides = [1, 1]} : vector<8x256xf32> to vector<4x256xf32>
    %8 = vector.extract_strided_slice %6 {offsets = [0, 0], sizes = [3, 256], strides = [1, 1]} : vector<12x256xf32> to vector<3x256xf32>
    %9 = vector.extract_strided_slice %7 {offsets = [0, 0], sizes = [1, 256], strides = [1, 1]} : vector<4x256xf32> to vector<1x256xf32>
    %10 = vector.broadcast %9 : vector<1x256xf32> to vector<3x256xf32>
    %11 = arith.mulf %8, %10 : vector<3x256xf32>
    %12 = vector.extract_strided_slice %6 {offsets = [3, 0], sizes = [3, 256], strides = [1, 1]} : vector<12x256xf32> to vector<3x256xf32>
    %13 = vector.extract_strided_slice %7 {offsets = [1, 0], sizes = [1, 256], strides = [1, 1]} : vector<4x256xf32> to vector<1x256xf32>
    %14 = vector.broadcast %13 : vector<1x256xf32> to vector<3x256xf32>
    %15 = arith.mulf %12, %14 : vector<3x256xf32>
    %16 = arith.addf %11, %15 : vector<3x256xf32>
    %17 = vector.extract_strided_slice %6 {offsets = [6, 0], sizes = [3, 256], strides = [1, 1]} : vector<12x256xf32> to vector<3x256xf32>
    %18 = vector.extract_strided_slice %7 {offsets = [2, 0], sizes = [1, 256], strides = [1, 1]} : vector<4x256xf32> to vector<1x256xf32>
    %19 = vector.broadcast %18 : vector<1x256xf32> to vector<3x256xf32>
    %20 = arith.mulf %17, %19 : vector<3x256xf32>
    %21 = arith.addf %16, %20 : vector<3x256xf32>
    %22 = vector.extract_strided_slice %6 {offsets = [9, 0], sizes = [3, 256], strides = [1, 1]} : vector<12x256xf32> to vector<3x256xf32>
    %23 = vector.extract_strided_slice %7 {offsets = [3, 0], sizes = [1, 256], strides = [1, 1]} : vector<4x256xf32> to vector<1x256xf32>
    %24 = vector.broadcast %23 : vector<1x256xf32> to vector<3x256xf32>
    %25 = arith.mulf %22, %24 : vector<3x256xf32>
    %26 = arith.addf %21, %25 : vector<3x256xf32>
    %c0_5 = arith.constant 0 : index
    %c0_6 = arith.constant 0 : index
    %c0_7 = arith.constant 0 : index
    %c0_8 = arith.constant 0 : index
    %27 = vector.load %arg4[%c0_5, %c0_6, %c0_7, %c0_8] : memref<1x2x3x256xf32, #tpu.memory_space<vmem>>, vector<1x1x3x256xf32>
    %28 = vector.shape_cast %27 : vector<1x1x3x256xf32> to vector<3x256xf32>
    %29 = vector.shape_cast %26 : vector<3x256xf32> to vector<1x1x3x256xf32>
    tpu.vector_store %arg4[%c0_5, %c0_6, %c0_7, %c0_8], %29 {strides = array<i32>} : memref<1x2x3x256xf32, #tpu.memory_space<vmem>>, vector<1x1x3x256xf32>,
    %30 = vector.extract_strided_slice %2 {offsets = [12, 0], sizes = [12, 256], strides = [1, 1]} : vector<24x256xf32> to vector<12x256xf32>
    %31 = vector.extract_strided_slice %5 {offsets = [4, 0], sizes = [4, 256], strides = [1, 1]} : vector<8x256xf32> to vector<4x256xf32>
    %32 = vector.extract_strided_slice %30 {offsets = [0, 0], sizes = [3, 256], strides = [1, 1]} : vector<12x256xf32> to vector<3x256xf32>
    %33 = vector.extract_strided_slice %31 {offsets = [0, 0], sizes = [1, 256], strides = [1, 1]} : vector<4x256xf32> to vector<1x256xf32>
    %34 = vector.broadcast %33 : vector<1x256xf32> to vector<3x256xf32>
    %35 = arith.mulf %32, %34 : vector<3x256xf32>
    %36 = vector.extract_strided_slice %30 {offsets = [3, 0], sizes = [3, 256], strides = [1, 1]} : vector<12x256xf32> to vector<3x256xf32>
    %37 = vector.extract_strided_slice %31 {offsets = [1, 0], sizes = [1, 256], strides = [1, 1]} : vector<4x256xf32> to vector<1x256xf32>
    %38 = vector.broadcast %37 : vector<1x256xf32> to vector<3x256xf32>
    %39 = arith.mulf %36, %38 : vector<3x256xf32>
    %40 = arith.addf %35, %39 : vector<3x256xf32>
    %41 = vector.extract_strided_slice %30 {offsets = [6, 0], sizes = [3, 256], strides = [1, 1]} : vector<12x256xf32> to vector<3x256xf32>
    %42 = vector.extract_strided_slice %31 {offsets = [2, 0], sizes = [1, 256], strides = [1, 1]} : vector<4x256xf32> to vector<1x256xf32>
    %43 = vector.broadcast %42 : vector<1x256xf32> to vector<3x256xf32>
    %44 = arith.mulf %41, %43 : vector<3x256xf32>
    %45 = arith.addf %40, %44 : vector<3x256xf32>
    %46 = vector.extract_strided_slice %30 {offsets = [9, 0], sizes = [3, 256], strides = [1, 1]} : vector<12x256xf32> to vector<3x256xf32>
    %47 = vector.extract_strided_slice %31 {offsets = [3, 0], sizes = [1, 256], strides = [1, 1]} : vector<4x256xf32> to vector<1x256xf32>
    %48 = vector.broadcast %47 : vector<1x256xf32> to vector<3x256xf32>
    %49 = arith.mulf %46, %48 : vector<3x256xf32>
    %50 = arith.addf %45, %49 : vector<3x256xf32>
    %c0_9 = arith.constant 0 : index
    %c1 = arith.constant 1 : index
    %c0_10 = arith.constant 0 : index
    %c0_11 = arith.constant 0 : index
    %51 = vector.load %arg4[%c0_9, %c1, %c0_10, %c0_11] : memref<1x2x3x256xf32, #tpu.memory_space<vmem>>, vector<1x1x3x256xf32>
    %52 = vector.shape_cast %51 : vector<1x1x3x256xf32> to vector<3x256xf32>
    %53 = vector.shape_cast %50 : vector<3x256xf32> to vector<1x1x3x256xf32>
    tpu.vector_store %arg4[%c0_9, %c1, %c0_10, %c0_11], %53 {strides = array<i32>} : memref<1x2x3x256xf32, #tpu.memory_space<vmem>>, vector<1x1x3x256xf32>,
    return
  }
  func.func @transform_0(%arg0: i32, %arg1: i32) -> (i32, i32, i32) {
    %c0_i32 = arith.constant 0 : i32
    %c0_i32_0 = arith.constant 0 : i32
    return %arg0, %c0_i32, %arg1 : i32, i32, i32
  }
  func.func @transform_1(%arg0: i32, %arg1: i32) -> (i32, i32, i32) {
    %c0_i32 = arith.constant 0 : i32
    %c0_i32_0 = arith.constant 0 : i32
    return %arg0, %c0_i32, %arg1 : i32, i32, i32
  }
  func.func @transform_2(%arg0: i32, %arg1: i32) -> (i32, i32, i32, i32) {
    %c0_i32 = arith.constant 0 : i32
    %c0_i32_0 = arith.constant 0 : i32
    %c0_i32_1 = arith.constant 0 : i32
    return %arg0, %c0_i32, %c0_i32_0, %arg1 : i32, i32, i32, i32
  }
}

</mosaic_0001>

<llo_original>
// kernel: tpu_custom_call.1
$region0: #{tpu_custom_call.1}
  #allocation0 [shape = 'u32[]', space=smem, size = 0x4, offset = 0x4, fixed_abs, tag = 'smem constant byte address 0x4 - core index']
  #allocation1 [shape = 'u32[144,128]{1,0:T(1,128)}', space=vmem, size = 0x12000, scoped, tag = 'internal scratch']
  %s0 = inlined_call_operand.hbm [shape: bf16[2,24,256], index: 0, kind: input, shape index: {}]
  %s1 = inlined_call_operand.hbm [shape: bf16[2,8,256], index: 1, kind: input, shape index: {}]
  %s2 = inlined_call_operand.vmem [shape: f32[2,2,3,256], index: 2, kind: output, shape index: {}]
  %s3 = sld [smem:[#allocation0]]
  $region49: #{tpu_custom_call.1} parent=0
    _
  %s5 = ssub.s32 1, %s3
  %s6 = scalar_select 0, %s5, %s3
  $region1: #{tpu_custom_call.1} parent=0
    #allocation2 [shape = 'u8[24576]{0}', space=vmem, size = 0x6000, scoped, tag = 'input window, operand 0']
    #allocation3 [shape = 's32[2]{0}', space=sflag, size = 0x8, scoped, tag = 'scoped memory for tpu_custom_call.1']
    #allocation4 [shape = 'u8[8192]{0}', space=vmem, size = 0x2000, scoped, tag = 'input window, operand 1']
    #allocation5 [shape = 's32[2]{0}', space=sflag, size = 0x8, scoped, tag = 'scoped memory for tpu_custom_call.1']
    %7 = vsyncpa [#allocation3], 0
    %s8 = scalar_lea.sflag [#allocation3], 1
    %9 = vsyncpa %s8, 0
    %10 = vsyncpa [#allocation5], 0
    %s11 = scalar_lea.sflag [#allocation5], 1
    %12 = vsyncpa %s11, 0
    loop: start=0, step=1, limit=4
    $region2: #{tpu_custom_call.1} parent=1 // loop_pre_header
      _
    $region3: #{tpu_custom_call.1} parent=1 // loop_header
      %s14 = sphi 0, %s18
      %p15 = scmp.ge.s32.totalorder %s14, 4
      %s21 = sphi 0, %s33
      %s22 = sphi 0, %s29
      %s23 = sphi 0, %s21
      %s24 = sphi 0, %s22
      %s25 = sphi 0, %s23
      %s26 = sphi 0, %s24
      %s38 = sphi 0, %s40
      %s41 = sphi 0, %s38
      %s42 = sphi 0, %s41
      %s58 = sphi 0, %s42
      %s66 = sphi 0, %s68
      %s69 = sphi 0, %s66
      %s70 = sphi 0, %s69
      %s86 = sphi 0, %s70
      %s94 = sphi 0, %s96
      %s97 = sphi 0, %s94
      %s98 = sphi 0, %s97
      %s114 = sphi 0, %s98
    $region4: #{tpu_custom_call.1} parent=1 // loop_header_branch
      %17 = sbr.rel (%p15) target = $region8
    $region5: #{tpu_custom_call.1} parent=1 // loop_body
      %s19 = ssub.s32 %s14, 1
      %s20 = ssub.s32 %s14, 2
      %s27 = sadd.s32 1, %s22
      %p28 = scmp.ge.s32.totalorder %s27, 1
      %s29 = scalar_select %p28, 0, %s27
      %s30 = sadd.s32 1, %s21
      %s31 = scalar_select %p28, %s30, %s21
      %p32 = scmp.ge.s32.totalorder %s31, 2
      %s33 = scalar_select %p32, 0, %s31
      %s34 = ssub.s32 %s21, %s33
      %s35 = ssub.s32 %s22, %s29
      %s36 = sor.u32 %s34, %s35
      %p37 = scmp.eq.s32.totalorder %s36, 0
      %s39 = sadd.s32 %s38, 1
      %s40 = scalar_select %p37, %s38, %s39
      %p43 = pneg %p37
      %p44 = scmp.eq.s32.totalorder %s14, 1
      %p45 = por %p43, %p44
      %p46 = scmp.ne.s32.totalorder %s38, %s41
      %p47 = scmp.eq.s32.totalorder %s14, 0
      %p48 = por %p46, %p47
      %p49 = scmp.ne.s32.totalorder %s38, %s41
      %p50 = scmp.eq.s32.totalorder %s19, 1
      %p51 = por %p49, %p50
      %p52 = scmp.ne.s32.totalorder %s41, %s42
      %p53 = scmp.eq.s32.totalorder %s19, 0
      %p54 = por %p52, %p53
      %p55 = scmp.ne.s32.totalorder %s41, %s42
      %p56 = scmp.eq.s32.totalorder %s20, 1
      %p57 = por %p55, %p56
      %p59 = scmp.ne.s32.totalorder %s42, %s58
      %p60 = scmp.eq.s32.totalorder %s20, 0
      %p61 = por %p59, %p60
      %s62 = ssub.s32 %s21, %s33
      %s63 = ssub.s32 %s22, %s29
      %s64 = sor.u32 %s62, %s63
      %p65 = scmp.eq.s32.totalorder %s64, 0
      %s67 = sadd.s32 %s66, 1
      %s68 = scalar_select %p65, %s66, %s67
      %p71 = pneg %p65
      %p72 = scmp.eq.s32.totalorder %s14, 1
      %p73 = por %p71, %p72
      %p74 = scmp.ne.s32.totalorder %s66, %s69
      %p75 = scmp.eq.s32.totalorder %s14, 0
      %p76 = por %p74, %p75
      %p77 = scmp.ne.s32.totalorder %s66, %s69
      %p78 = scmp.eq.s32.totalorder %s19, 1
      %p79 = por %p77, %p78
      %p80 = scmp.ne.s32.totalorder %s69, %s70
      %p81 = scmp.eq.s32.totalorder %s19, 0
      %p82 = por %p80, %p81
      %p83 = scmp.ne.s32.totalorder %s69, %s70
      %p84 = scmp.eq.s32.totalorder %s20, 1
      %p85 = por %p83, %p84
      %p87 = scmp.ne.s32.totalorder %s70, %s86
      %p88 = scmp.eq.s32.totalorder %s20, 0
      %p89 = por %p87, %p88
      %s90 = ssub.s32 %s21, %s33
      %s91 = ssub.s32 %s22, %s29
      %s92 = sor.u32 %s90, %s91
      %p93 = scmp.eq.s32.totalorder %s92, 0
      %s95 = sadd.s32 %s94, 1
      %s96 = scalar_select %p93, %s94, %s95
      %p99 = pneg %p93
      %p100 = scmp.eq.s32.totalorder %s14, 1
      %p101 = por %p99, %p100
      %p102 = scmp.ne.s32.totalorder %s94, %s97
      %p103 = scmp.eq.s32.totalorder %s14, 0
      %p104 = por %p102, %p103
      %p105 = scmp.ne.s32.totalorder %s94, %s97
      %p106 = scmp.eq.s32.totalorder %s19, 1
      %p107 = por %p105, %p106
      %p108 = scmp.ne.s32.totalorder %s97, %s98
      %p109 = scmp.eq.s32.totalorder %s19, 0
      %p110 = por %p108, %p109
      %p111 = scmp.ne.s32.totalorder %s97, %s98
      %p112 = scmp.eq.s32.totalorder %s20, 1
      %p113 = por %p111, %p112
      %p115 = scmp.ne.s32.totalorder %s98, %s114
      %p116 = scmp.eq.s32.totalorder %s20, 0
      %p117 = por %p115, %p116
      %p118 = scmp.le.s32.totalorder 1, %s14
      %p119 = scmp.lt.s32.totalorder %s14, 3
      %p120 = pnand %p118, %p119
      %p121 = pneg %p120
      // Predicated region
      $region9: #{tpu_custom_call.1} parent=5 // pred_check
        _
      $region10: #{tpu_custom_call.1} parent=5 // pred_check_branch
        %123 = sbr.rel (%p120) target = $region12
      $region11: #{tpu_custom_call.1} parent=5 // pred_region
        %s124 = ssub.s32 %s14, 1
      $region12: #{tpu_custom_call.1} parent=5 // pred_fallthru
        _
      %p125 = scmp.lt.s32.totalorder %s14, 2
      // Predicated region
      $region13: #{tpu_custom_call.1} parent=5 // pred_check
        %p126 = pneg %p125
      $region14: #{tpu_custom_call.1} parent=5 // pred_check_branch
        %128 = sbr.rel (%p126) target = $region16
      $region15: #{tpu_custom_call.1} parent=5 // pred_region
        // Predicated region
        $region17: #{tpu_custom_call.1} parent=15 // pred_check
          %p129 = pneg %p48
        $region18: #{tpu_custom_call.1} parent=15 // pred_check_branch
          %131 = sbr.rel (%p129) target = $region20
        $region19: #{tpu_custom_call.1} parent=15 // pred_region
          %s132 = sand.u32 %s38, 1
          %s133 = scalar_lea.sflag [#allocation3], %s132
          %s134 = sand.u32 %s38, 1
          %s135 = smul.addr %s134, 24
          %s136 = scalar_lea.vmem [#allocation2], %s135
          %s137 = smul.u32 2, %s22
          %s139 = ssub.s32 384, 384
          %140 = vsyncadd %s133, %s139
          %s141 = smul.addr %s21, 6
          %s142 = sadd.s32 %s137, %s141
          %s143 = smul.addr %s142, 64
          %s144 = scalar_lea.hbm %s0, %s143
          %s145 = sshll.u32 %s136, 4
          %s146 = int_to_ptr.vmem [resolvable:$true] %s145
          %151 = dma.hbm_to_vmem [thread:$0]  %s144, 384, %s146, %s133, 128, 128, 8
        $region20: #{tpu_custom_call.1} parent=15 // pred_fallthru
          _
        // Predicated region
        $region21: #{tpu_custom_call.1} parent=15 // pred_check
          %p152 = pneg %p76
        $region22: #{tpu_custom_call.1} parent=15 // pred_check_branch
          %154 = sbr.rel (%p152) target = $region24
        $region23: #{tpu_custom_call.1} parent=15 // pred_region
          %s155 = sand.u32 %s66, 1
          %s156 = scalar_lea.sflag [#allocation5], %s155
          %s157 = sand.u32 %s66, 1
          %s158 = smul.addr %s157, 8
          %s159 = scalar_lea.vmem [#allocation4], %s158
          %s160 = smul.u32 2, %s22
          %s162 = ssub.s32 128, 128
          %163 = vsyncadd %s156, %s162
          %s164 = smul.addr %s21, 2
          %s165 = sadd.s32 %s160, %s164
          %s166 = smul.addr %s165, 64
          %s167 = scalar_lea.hbm %s1, %s166
          %s169 = sshll.u32 %s159, 4
          %s170 = int_to_ptr.vmem [resolvable:$true] %s169
          %172 = dma.hbm_to_vmem [thread:$0]  %s167, 128, %s170, %s156
        $region24: #{tpu_custom_call.1} parent=15 // pred_fallthru
          _
      $region16: #{tpu_custom_call.1} parent=5 // pred_fallthru
        _
      %p173 = scmp.le.s32.totalorder 1, %s14
      %p174 = scmp.lt.s32.totalorder %s14, 3
      %p175 = pnand %p173, %p174
      %p176 = pneg %p175
      // Predicated region
      $region25: #{tpu_custom_call.1} parent=5 // pred_check
        _
      $region26: #{tpu_custom_call.1} parent=5 // pred_check_branch
        %178 = sbr.rel (%p175) target = $region28
      $region27: #{tpu_custom_call.1} parent=5 // pred_region
        %s179 = ssub.s32 %s14, 1
        %s180 = sand.u32 %s41, 1
        %s181 = scalar_lea.sflag [#allocation3], %s180
        %s182 = sand.u32 %s41, 1
        %s183 = smul.addr %s182, 24
        %s184 = scalar_lea.vmem [#allocation2], %s183
        // Predicated region
        $region29: #{tpu_custom_call.1} parent=27 // pred_check
          %p185 = pneg %p54
        $region30: #{tpu_custom_call.1} parent=27 // pred_check_branch
          %187 = sbr.rel (%p185) target = $region32
        $region31: #{tpu_custom_call.1} parent=27 // pred_region
          %188 = dma.done %s181, 384
        $region32: #{tpu_custom_call.1} parent=27 // pred_fallthru
          _
        %s189 = sand.u32 %s69, 1
        %s190 = scalar_lea.sflag [#allocation5], %s189
        %s191 = sand.u32 %s69, 1
        %s192 = smul.addr %s191, 8
        %s193 = scalar_lea.vmem [#allocation4], %s192
        // Predicated region
        $region33: #{tpu_custom_call.1} parent=27 // pred_check
          %p194 = pneg %p82
        $region34: #{tpu_custom_call.1} parent=27 // pred_check_branch
          %196 = sbr.rel (%p194) target = $region36
        $region35: #{tpu_custom_call.1} parent=27 // pred_region
          %197 = dma.done %s190, 128
        $region36: #{tpu_custom_call.1} parent=27 // pred_fallthru
          _
        %s198 = sand.u32 %s41, 1
        %s199 = scalar_lea.sflag [#allocation3], %s198
        %s200 = sand.u32 %s41, 1
        %s201 = smul.addr %s200, 24
        %s202 = scalar_lea.vmem [#allocation2], %s201
        %p203 = pneg %p54
        %p204 = pneg %p51
        %s205 = sand.u32 %s69, 1
        %s206 = scalar_lea.sflag [#allocation5], %s205
        %s207 = sand.u32 %s69, 1
        %s208 = smul.addr %s207, 8
        %s209 = scalar_lea.vmem [#allocation4], %s208
        %p210 = pneg %p82
        %p211 = pneg %p79
        %p212 = pneg %p110
        %p213 = pneg %p107
        %s214 = smul.u32 2, %s24
        %p215 = scmp.lt.s32.totalorder %s23, 1
        %s216 = scalar_select %p215, %s23, 1
        %p217 = scmp.lt.s32.totalorder %s214, 1
        %s218 = scalar_select %p217, %s214, 1
        %s219 = smul.addr %s216, 4
        %s220 = sadd.s32 %s218, %s219
        %s221 = smul.addr %s220, 4
        %s222 = scalar_lea.vmem %s2, %s221
        %s223 = smul.u32 2, %s24
        %s224 = smul.u32 2, %s24
        %s225 = smul.u32 2, %s24
        %p226 = scmp.lt.s32.totalorder %s23, 1
        %s227 = scalar_select %p226, %s23, 1
        %p228 = scmp.lt.s32.totalorder %s225, 1
        %s229 = scalar_select %p228, %s225, 1
        %s230 = smul.addr %s227, 4
        %s231 = sadd.s32 %s229, %s230
        %s232 = smul.addr %s231, 4
        %s233 = scalar_lea.vmem %s2, %s232
        %s234 = smul.u32 2, %s24
        %v235 = vld [vmem:[%s184] sm:$0xff]
        %v236 = vld [vmem:[%s184 + $0x8] sm:$0xff]
        %v237 = vld [vmem:[%s184 + $0x10] sm:$0xff]
        %v238 = vunpack.c.l.bf16 %v235
        %v239 = vunpack.c.h.bf16 %v235
        %v240 = vunpack.c.l.bf16 %v236
        %v241 = vunpack.c.h.bf16 %v236
        %v242 = vunpack.c.l.bf16 %v237
        %v243 = vunpack.c.h.bf16 %v237
        %v244 = vld [vmem:[%s193] sm:$0xff]
        %v245 = vunpack.c.l.bf16 %v244
        %v246 = vunpack.c.h.bf16 %v244
        %v247 = vlaneseq
        %v248 = vshrl.u32 %v247, 7
        %v249 = vsub.s32 0, %v248
        %v250 = vrot.slane %v245, %v249
        %v251 = vlaneseq
        %v252 = vshrl.u32 %v251, 7
        %v253 = vsub.s32 0, %v252
        %v254 = vrot.slane %v246, %v253
        %v255 = vmul.f32 %v238, %v250
        %v256 = vmul.f32 %v239, %v254
        %v257 = vlaneseq
        %v258 = vshrl.u32 %v257, 7
        %v259 = vsub.s32 1, %v258
        %v260 = vrot.slane %v245, %v259
        %v261 = vlaneseq
        %v262 = vshrl.u32 %v261, 7
        %v263 = vsub.s32 1, %v262
        %v264 = vrot.slane %v246, %v263
        %v265 = vmul.f32 %v238, %v260
        %v266 = vmul.f32 %v239, %v264
        %v269 = vrot.slane %v265, 3
        %v270 = vrot.slane %v266, 3
        %v273 = vadd.f32 %v255, %v269
        %v274 = vadd.f32 %v256, %v270
        %v275 = vlaneseq
        %v276 = vshrl.u32 %v275, 7
        %v277 = vsub.s32 2, %v276
        %v278 = vrot.slane %v245, %v277
        %v279 = vlaneseq
        %v280 = vshrl.u32 %v279, 7
        %v281 = vsub.s32 2, %v280
        %v282 = vrot.slane %v246, %v281
        %v283 = vmul.f32 %v238, %v278
        %v284 = vmul.f32 %v239, %v282
        %v285 = vmul.f32 %v240, %v278
        %v286 = vmul.f32 %v241, %v282
        %vm291 = vcmask 1041408
        %v292 = vrot.slane %v283, 6
        %v293 = vrot.slane %v285, 6
        %v294 = vsel %vm291, %v292, %v293
        %v295 = vrot.slane %v284, 6
        %v296 = vrot.slane %v286, 6
        %v297 = vsel %vm291, %v295, %v296
        %v300 = vadd.f32 %v273, %v294
        %v301 = vadd.f32 %v274, %v297
        %v302 = vlaneseq
        %v303 = vshrl.u32 %v302, 7
        %v304 = vsub.s32 3, %v303
        %v305 = vrot.slane %v245, %v304
        %v306 = vlaneseq
        %v307 = vshrl.u32 %v306, 7
        %v308 = vsub.s32 3, %v307
        %v309 = vrot.slane %v246, %v308
        %v310 = vmul.f32 %v240, %v305
        %v311 = vmul.f32 %v241, %v309
        %v314 = vrot.slane %v310, 1
        %v315 = vrot.slane %v311, 1
        %v318 = vadd.f32 %v300, %v314
        %v319 = vadd.f32 %v301, %v315
        %v322 = vcombine.low %v318, %v319
        %324 = vst [vmem:[%s233] sm:$0x77] %v322
        %v325 = vlaneseq
        %v326 = vshrl.u32 %v325, 7
        %v327 = vsub.s32 4, %v326
        %v328 = vrot.slane %v245, %v327
        %v329 = vlaneseq
        %v330 = vshrl.u32 %v329, 7
        %v331 = vsub.s32 4, %v330
        %v332 = vrot.slane %v246, %v331
        %v333 = vmul.f32 %v240, %v328
        %v334 = vmul.f32 %v241, %v332
        %v335 = vlaneseq
        %v336 = vshrl.u32 %v335, 7
        %v337 = vsub.s32 5, %v336
        %v338 = vrot.slane %v245, %v337
        %v339 = vlaneseq
        %v340 = vshrl.u32 %v339, 7
        %v341 = vsub.s32 5, %v340
        %v342 = vrot.slane %v246, %v341
        %v343 = vmul.f32 %v240, %v338
        %v344 = vmul.f32 %v241, %v342
        %v345 = vmul.f32 %v242, %v338
        %v346 = vmul.f32 %v243, %v342
        %vm351 = vcmask 1044480
        %v352 = vrot.slane %v343, 3
        %v353 = vrot.slane %v345, 3
        %v354 = vsel %vm351, %v352, %v353
        %v355 = vrot.slane %v344, 3
        %v356 = vrot.slane %v346, 3
        %v357 = vsel %vm351, %v355, %v356
        %v360 = vadd.f32 %v333, %v354
        %v361 = vadd.f32 %v334, %v357
        %v362 = vlaneseq
        %v363 = vshrl.u32 %v362, 7
        %v364 = vsub.s32 6, %v363
        %v365 = vrot.slane %v245, %v364
        %v366 = vlaneseq
        %v367 = vshrl.u32 %v366, 7
        %v368 = vsub.s32 6, %v367
        %v369 = vrot.slane %v246, %v368
        %v370 = vmul.f32 %v242, %v365
        %v371 = vmul.f32 %v243, %v369
        %v374 = vrot.slane %v370, 6
        %v375 = vrot.slane %v371, 6
        %v378 = vadd.f32 %v360, %v374
        %v379 = vadd.f32 %v361, %v375
        %v380 = vlaneseq
        %v381 = vshrl.u32 %v380, 7
        %v382 = vsub.s32 7, %v381
        %v383 = vrot.slane %v245, %v382
        %v384 = vlaneseq
        %v385 = vshrl.u32 %v384, 7
        %v386 = vsub.s32 7, %v385
        %v387 = vrot.slane %v246, %v386
        %v388 = vmul.f32 %v242, %v383
        %v389 = vmul.f32 %v243, %v387
        %v392 = vrot.slane %v388, 1
        %v393 = vrot.slane %v389, 1
        %v396 = vadd.f32 %v378, %v392
        %v397 = vadd.f32 %v379, %v393
        %v400 = vcombine.high %v396, %v397
        %s402 = scalar_lea.vmem %s233, 8
        %403 = vst [vmem:[%s402] sm:$0x77] %v400
        %s404 = smul.u32 2, %s24
        %p405 = scmp.lt.s32.totalorder %s23, 1
        %s406 = scalar_select %p405, %s23, 1
        %p407 = scmp.lt.s32.totalorder %s404, 1
        %s408 = scalar_select %p407, %s404, 1
        %s409 = smul.addr %s406, 4
        %s410 = sadd.s32 %s408, %s409
        %s411 = smul.addr %s410, 4
        %s412 = scalar_lea.vmem %s2, %s411
        // Predicated region
        $region37: #{tpu_custom_call.1} parent=27 // pred_check
          %p413 = pneg %p107
        $region38: #{tpu_custom_call.1} parent=27 // pred_check_branch
          %415 = sbr.rel (%p413) target = $region40
        $region39: #{tpu_custom_call.1} parent=27 // pred_region
          %s416 = smul.u32 2, %s24
        $region40: #{tpu_custom_call.1} parent=27 // pred_fallthru
          _
      $region28: #{tpu_custom_call.1} parent=5 // pred_fallthru
        _
      %p417 = scmp.le.s32.totalorder 2, %s14
      // Predicated region
      $region41: #{tpu_custom_call.1} parent=5 // pred_check
        %p418 = pneg %p417
      $region42: #{tpu_custom_call.1} parent=5 // pred_check_branch
        %420 = sbr.rel (%p418) target = $region44
      $region43: #{tpu_custom_call.1} parent=5 // pred_region
        %s421 = ssub.s32 %s14, 2
        // Predicated region
        $region45: #{tpu_custom_call.1} parent=43 // pred_check
          %p422 = pneg %p113
        $region46: #{tpu_custom_call.1} parent=43 // pred_check_branch
          %424 = sbr.rel (%p422) target = $region48
        $region47: #{tpu_custom_call.1} parent=43 // pred_region
          %s425 = smul.u32 2, %s26
          %p426 = scmp.lt.s32.totalorder %s25, 1
          %s427 = scalar_select %p426, %s25, 1
          %p428 = scmp.lt.s32.totalorder %s425, 1
          %s429 = scalar_select %p428, %s425, 1
          %s430 = smul.addr %s427, 4
          %s431 = sadd.s32 %s429, %s430
          %s432 = smul.addr %s431, 4
          %s433 = scalar_lea.vmem %s2, %s432
        $region48: #{tpu_custom_call.1} parent=43 // pred_fallthru
          _
      $region44: #{tpu_custom_call.1} parent=5 // pred_fallthru
        _
    $region6: #{tpu_custom_call.1} parent=1 // loop_footer
      %s18 = sadd.s32 1, %s14
    $region7: #{tpu_custom_call.1} parent=1 // loop_footer_branch
      %13 = sbr.rel target = $region3
    $region8: #{tpu_custom_call.1} parent=1 // loop_exit
      _
    %434 = vsyncpa [#allocation3], 1
    %s435 = scalar_lea.sflag [#allocation3], 1
    %436 = vsyncpa %s435, 1
    %437 = vsyncpa [#allocation5], 1
    %s438 = scalar_lea.sflag [#allocation5], 1
    %439 = vsyncpa %s438, 1

</llo_original>
